<compile_context>
chip_gen: v7x
topology: tpu7x:2x2x1
jax: 0.10.0
libtpu: 0.0.40
codegen_flags: <defaults>
</compile_context>

<pallas_src>
import jax
import jax.numpy as jnp
from jax.experimental import pallas as pl
from jax.experimental.pallas import tpu as pltpu


def _noise_kernel(w_ref, x_ref, n_ref, o_ref):
    # w_ref: (1,)            scalar weight in SMEM (f32)
    # x_ref: (TB, TM, TN)    VMEM tile of x
    # n_ref: (TB, 1, TN) or (TB, TM, 1)  VMEM noise tile (broadcast in-kernel)
    # o_ref: (TB, TM, TN)    VMEM output tile
    w = w_ref[0]                                             # hoist scalar read
    o_ref[...] = (x_ref[...] + n_ref[...] * w).astype(o_ref.dtype)


def _sublane_quantum(itemsize):
    # Native sublane packing: f32 -> 8, bf16 -> 16, int8/fp8 -> 32.
    return max(8, 32 // itemsize)


def _largest_aligned_divisor(n, cap, q):
    """Largest d <= cap with d % q == 0 and n % d == 0, else None."""
    d = (min(cap, n) // q) * q
    while d >= q:
        if n % d == 0:
            return d
        d -= q
    return None


def _largest_divisor_leq(n, cap):
    cap = max(1, min(cap, n))
    for d in range(cap, 0, -1):
        if n % d == 0:
            return d
    return 1


def _pick_tiles(b, m, n, itemsize, target=2 << 20):
    """Pick (tb, tm, tn) so one x tile is ~target bytes, lane/sublane aligned."""
    q = _sublane_quantum(itemsize)

    # Lane tile (last axis): full N when a q-sublane slab fits, else
    # 128-multiple chunks (H*W fallback for very large feature maps).
    if n <= 128 or n * q * itemsize <= target:
        tn = n
    else:
        tn = max(128, (target // (q * itemsize)) // 128 * 128)

    # Sublane tile (second-to-last axis): full, or quantum-aligned divisor.
    row_bytes = tn * itemsize
    if tn == n and m * row_bytes <= target:
        tm = m
    else:
        cap = max(q, (target // row_bytes) // q * q)
        if m <= cap:
            tm = m
        else:
            tm = _largest_aligned_divisor(m, cap, q) or cap

    # Batch tile: fold batches together until a step moves ~target bytes.
    slab = tm * tn * itemsize
    if tm == m and tn == n:
        tb = max(1, min(b, target // max(1, slab)))
    else:
        tb = 1

    # If the grid would collapse to one step on a non-trivial tensor, split the
    # batch so both TensorCores (v7x megacore) actually get work.
    total = b * m * n * itemsize
    if tb >= b and b >= 2 and total >= (512 << 10):
        tb = -(-b // 2)

    # Prefer an even batch split.
    tb = _largest_divisor_leq(b, tb)
    return tb, tm, tn


def noise_forward(x, noise, weight, *, donate_x=False):
    """x: (B, C, H, W); noise: (B, 1, H, W); weight: (1,) scalar param."""
    b, c, h, w = x.shape
    hw = h * w
    itemsize = jnp.dtype(x.dtype).itemsize

    # Layout choice: keep the lane (last) axis wide so stores are unmasked.
    channel_last = (hw < 128) and (c >= 128)
    if channel_last:
        x3 = jnp.swapaxes(x.reshape(b, c, hw), 1, 2)       # (B, HW, C)
        n3 = jnp.swapaxes(noise.reshape(b, 1, hw), 1, 2)   # (B, HW, 1)
        m_dim, n_dim = hw, c
    else:
        x3 = x.reshape(b, c, hw)                           # (B, C, HW)
        n3 = noise.reshape(b, 1, hw)                       # (B, 1, HW)
        m_dim, n_dim = c, hw

    tb, tm, tn = _pick_tiles(b, m_dim, n_dim, itemsize)
    grid = (pl.cdiv(b, tb), pl.cdiv(m_dim, tm), pl.cdiv(n_dim, tn))

    if channel_last:
        noise_spec = pl.BlockSpec((tb, tm, 1), lambda i, j, k: (i, j, 0))
        noise_tile_bytes = tb * tm * itemsize
    else:
        noise_spec = pl.BlockSpec((tb, 1, tn), lambda i, j, k: (i, 0, k))
        noise_tile_bytes = tb * tn * itemsize

    # Explicit VMEM budget: double-buffered x + out + noise tiles, plus slack.
    x_tile_bytes = tb * tm * tn * itemsize
    vmem_limit = int(min(max(4 * x_tile_bytes + 2 * noise_tile_bytes + (4 << 20),
                             16 << 20), 64 << 20))

    # Weight: f32 scalar in SMEM (32-bit scalar path), cast result back to x dtype.
    w1 = jnp.asarray(weight, jnp.float32).reshape(1)

    # Advisory cost hint: pure streaming kernel (read x + noise, write out).
    cost = pl.CostEstimate(
        flops=2 * b * c * hw,
        transcendentals=0,
        bytes_accessed=(2 * b * c * hw + b * hw) * itemsize,
    )

    extra = {}
    if donate_x:
        # Alias x (input index 1) to the output; pair with jit donation of x.
        extra["input_output_aliases"] = {1: 0}

    out = pl.pallas_call(
        _noise_kernel,
        out_shape=jax.ShapeDtypeStruct(x3.shape, x.dtype),
        grid=grid,
        in_specs=[
            pl.BlockSpec(memory_space=pltpu.MemorySpace.SMEM),        # weight
            pl.BlockSpec((tb, tm, tn), lambda i, j, k: (i, j, k)),    # x tile
            noise_spec,                                               # noise
        ],
        out_specs=pl.BlockSpec((tb, tm, tn), lambda i, j, k: (i, j, k)),
        compiler_params=pltpu.CompilerParams(
            dimension_semantics=("parallel", "parallel", "parallel"),
            vmem_limit_bytes=vmem_limit),
        cost_estimate=cost,
        **extra,
    )(w1, x3, n3)

    if channel_last:
        out = jnp.swapaxes(out, 1, 2)
    return out.reshape(b, c, h, w)


if __name__ == "__main__":
    key = jax.random.PRNGKey(0)
    kx, kn, kx2, kn2 = jax.random.split(key, 4)

    # nn.Parameter(torch.zeros(1)) -> zeros; perturb deterministically so the
    # broadcasted multiply-add path is actually exercised.
    weight = jnp.zeros((1,), dtype=jnp.float32) + 0.5

    # Case 1: H*W >= 128 -> (B, C, H*W) layout (lane axis = spatial).
    B, C, H, W = 2, 4, 16, 16
    x = jax.random.normal(kx, (B, C, H, W), dtype=jnp.float32)
    # TODO(synk): PyTorch generates noise internally when not provided; here it
    # is a deterministic explicit input (same semantics as passing `noise=`).
    noise = jax.random.normal(kn, (B, 1, H, W), dtype=jnp.float32)
    out = jax.block_until_ready(noise_forward(x, noise, weight))
    ref = x + weight[0] * noise
    assert out.shape == (B, C, H, W)
    assert jnp.allclose(out, ref, atol=1e-6, rtol=1e-6)

    # Case 2: H*W < 128, C >= 128 -> channel-last layout (lane axis = C).
    B2, C2, H2, W2 = 2, 128, 8, 8
    x2 = jax.random.normal(kx2, (B2, C2, H2, W2), dtype=jnp.float32)
    noise2 = jax.random.normal(kn2, (B2, 1, H2, W2), dtype=jnp.float32)
    out2 = jax.block_until_ready(noise_forward(x2, noise2, weight))
    ref2 = x2 + weight[0] * noise2
    assert out2.shape == (B2, C2, H2, W2)
    assert jnp.allclose(out2, ref2, atol=1e-6, rtol=1e-6)

    print("KERNEL_OK")
</pallas_src>

<mosaic_0001>
module attributes {stable_mosaic.version = 11 : i64} {
  func.func @_noise_kernel(%arg0: i32, %arg1: i32, %arg2: i32, %arg3: memref<1xf32, #tpu.memory_space<smem>>, %arg4: memref<2x4x256xf32, #tpu.memory_space<vmem>>, %arg5: memref<2x1x256xf32, #tpu.memory_space<vmem>>, %arg6: memref<2x4x256xf32, #tpu.memory_space<vmem>>) attributes {dimension_semantics = [#tpu.dimension_semantics<parallel>, #tpu.dimension_semantics<parallel>, #tpu.dimension_semantics<parallel>], iteration_bounds = array<i64: 1, 1, 1>, scalar_prefetch = 0 : i64, scratch_operands = 0 : i64, tpu.core_type = #tpu.core_type<tc>, window_params = [{transform_indices = @transform_0, window_bounds = array<i64: 1>}, {transform_indices = @transform_1, window_bounds = array<i64: 2, 4, 256>}, {transform_indices = @transform_2, window_bounds = array<i64: 2, 1, 256>}, {transform_indices = @transform_3, window_bounds = array<i64: 2, 4, 256>}]} {
    %c0 = arith.constant 0 : index
    %0 = memref.load %arg3[%c0] : memref<1xf32, #tpu.memory_space<smem>>
    %c0_0 = arith.constant 0 : index
    %c0_1 = arith.constant 0 : index
    %c0_2 = arith.constant 0 : index
    %1 = vector.load %arg4[%c0_0, %c0_1, %c0_2] : memref<2x4x256xf32, #tpu.memory_space<vmem>>, vector<2x4x256xf32>
    %c0_3 = arith.constant 0 : index
    %c0_4 = arith.constant 0 : index
    %c0_5 = arith.constant 0 : index
    %2 = vector.load %arg5[%c0_3, %c0_4, %c0_5] : memref<2x1x256xf32, #tpu.memory_space<vmem>>, vector<2x1x256xf32>
    %3 = vector.broadcast %0 : f32 to vector<2x1x256xf32>
    %4 = arith.mulf %2, %3 : vector<2x1x256xf32>
    %5 = vector.broadcast %4 : vector<2x1x256xf32> to vector<2x4x256xf32>
    %6 = arith.addf %1, %5 : vector<2x4x256xf32>
    %c0_6 = arith.constant 0 : index
    %c0_7 = arith.constant 0 : index
    %c0_8 = arith.constant 0 : index
    %7 = vector.load %arg6[%c0_6, %c0_7, %c0_8] : memref<2x4x256xf32, #tpu.memory_space<vmem>>, vector<2x4x256xf32>
    tpu.vector_store %arg6[%c0_6, %c0_7, %c0_8], %6 {strides = array<i32>} : memref<2x4x256xf32, #tpu.memory_space<vmem>>, vector<2x4x256xf32>,
    return
  }
  func.func @transform_0(%arg0: i32, %arg1: i32, %arg2: i32) -> i32 {
    %c0_i32 = arith.constant 0 : i32
    %c0_i32_0 = arith.constant 0 : i32
    return %c0_i32 : i32
  }
  func.func @transform_1(%arg0: i32, %arg1: i32, %arg2: i32) -> (i32, i32, i32) {
    %c0_i32 = arith.constant 0 : i32
    return %arg0, %arg1, %arg2 : i32, i32, i32
  }
  func.func @transform_2(%arg0: i32, %arg1: i32, %arg2: i32) -> (i32, i32, i32) {
    %c0_i32 = arith.constant 0 : i32
    %c0_i32_0 = arith.constant 0 : i32
    return %arg0, %c0_i32, %arg2 : i32, i32, i32
  }
  func.func @transform_3(%arg0: i32, %arg1: i32, %arg2: i32) -> (i32, i32, i32) {
    %c0_i32 = arith.constant 0 : i32
    return %arg0, %arg1, %arg2 : i32, i32, i32
  }
}

</mosaic_0001>

<llo_original>
// kernel: tpu_custom_call.1
$region0: #{tpu_custom_call.1}
  #allocation0 [shape = 'u32[]', space=smem, size = 0x4, offset = 0x4, fixed_abs, tag = 'smem constant byte address 0x4 - core index']
  #allocation1 [shape = 'u32[144,128]{1,0:T(1,128)}', space=vmem, size = 0x12000, scoped, tag = 'internal scratch']
  #allocation2 [shape = 'f32[1]{0:T(128)S(6)}', space=smem, size = 0x200, scoped, tag = 'scoped memory for tpu_custom_call.1']
  %s0 = inlined_call_operand.<no memory space> [shape: f32[1], index: 0, kind: input, shape index: {}]
  %s1 = inlined_call_operand.hbm [shape: f32[2,4,256], index: 1, kind: input, shape index: {}]
  %s2 = inlined_call_operand.vmem [shape: f32[2,1,256], index: 2, kind: input, shape index: {}]
  %s3 = inlined_call_operand.hbm [shape: f32[2,4,256], index: 3, kind: output, shape index: {}]
  %s4 = sld [smem:[#allocation0]]
  $region26: #{tpu_custom_call.1} parent=0
    _
  %s6 = ssub.s32 1, %s4
  %s7 = scalar_select 0, %s6, %s4
  %8 = sst [smem:[#allocation2]] %s0
  $region1: #{tpu_custom_call.1} parent=0
    #allocation3 [shape = 'u8[8192]{0}', space=vmem, size = 0x2000, scoped, tag = 'input window, operand 1, single buffered']
    #allocation4 [shape = 's32[1]{0}', space=sflag, size = 0x4, scoped, tag = 'scoped memory for tpu_custom_call.1']
    #allocation5 [shape = 's32[1]{0}', space=sflag, size = 0x4, scoped, tag = 'scoped memory for tpu_custom_call.1']
    #allocation6 [shape = 'u8[8192]{0}', space=vmem, size = 0x2000, scoped, tag = 'output window, operand 0, single buffered']
    %9 = vsyncpa [#allocation4], 0
    %10 = vsyncpa [#allocation5], 0
    // Predicated region
    $region2: #{tpu_custom_call.1} parent=1 // pred_check
      _
    $region3: #{tpu_custom_call.1} parent=1 // pred_check_branch
      %12 = sbr.rel (0) target = $region5
    $region4: #{tpu_custom_call.1} parent=1 // pred_region
      _
    $region5: #{tpu_custom_call.1} parent=1 // pred_fallthru
      _
    // Predicated region
    $region6: #{tpu_custom_call.1} parent=1 // pred_check
      _
    $region7: #{tpu_custom_call.1} parent=1 // pred_check_branch
      %14 = sbr.rel (0) target = $region9
    $region8: #{tpu_custom_call.1} parent=1 // pred_region
      %s16 = ssub.s32 256, 256
      %17 = vsyncadd [#allocation4], %s16
      %s18 = sshll.u32 [#allocation3], 4
      %s19 = int_to_ptr.vmem [resolvable:$true] %s18
      %24 = dma.hbm_to_vmem [thread:$0]  %s1, 256, %s19, [#allocation4], 128, 128, 8
    $region9: #{tpu_custom_call.1} parent=1 // pred_fallthru
      _
    // Predicated region
    $region10: #{tpu_custom_call.1} parent=1 // pred_check
      _
    $region11: #{tpu_custom_call.1} parent=1 // pred_check_branch
      %26 = sbr.rel (0) target = $region13
    $region12: #{tpu_custom_call.1} parent=1 // pred_region
      _
    $region13: #{tpu_custom_call.1} parent=1 // pred_fallthru
      _
    // Predicated region
    $region14: #{tpu_custom_call.1} parent=1 // pred_check
      _
    $region15: #{tpu_custom_call.1} parent=1 // pred_check_branch
      %28 = sbr.rel (0) target = $region17
    $region16: #{tpu_custom_call.1} parent=1 // pred_region
      %29 = dma.done [#allocation4], 256
    $region17: #{tpu_custom_call.1} parent=1 // pred_fallthru
      _
    %s30 = sld [smem:[#allocation2]]
    %v31 = vld [vmem:[#allocation3] sm:$0xff]
    %v32 = vld [vmem:[#allocation3 + $0x8] sm:$0xff]
    %v33 = vld [vmem:[%s2] sm:$0x3]
    %v34 = vld [vmem:[%s2 + $0x2] sm:$0x3]
    %v35 = vstv %s30
    %v36 = vmul.f32 %v33, %v35
    %v37 = vmul.f32 %v34, %v35
    %v40 = vlaneseq
    %v41 = vshrl.u32 %v40, 7
    %v42 = vsub.s32 0, %v41
    %v43 = vrot.slane %v36, %v42
    %v44 = vlaneseq
    %v45 = vshrl.u32 %v44, 7
    %v46 = vsub.s32 1, %v45
    %v47 = vrot.slane %v36, %v46
    %v48 = vlaneseq
    %v49 = vshrl.u32 %v48, 7
    %v50 = vsub.s32 0, %v49
    %v51 = vrot.slane %v37, %v50
    %v52 = vlaneseq
    %v53 = vshrl.u32 %v52, 7
    %v54 = vsub.s32 1, %v53
    %v55 = vrot.slane %v37, %v54
    %v56 = vcombine.low %v43, %v47
    %v57 = vcombine.low %v51, %v55
    %v60 = vadd.f32 %v31, %v56
    %v61 = vadd.f32 %v32, %v57
    %62 = vst [vmem:[#allocation6] sm:$0xff] %v60
    %63 = vst [vmem:[#allocation6 + $0x8] sm:$0xff] %v61
    // Predicated region
    $region18: #{tpu_custom_call.1} parent=1 // pred_check
      _
    $region19: #{tpu_custom_call.1} parent=1 // pred_check_branch
      %65 = sbr.rel (0) target = $region21
    $region20: #{tpu_custom_call.1} parent=1 // pred_region
      %s67 = ssub.s32 256, 256
      %68 = vsyncadd [#allocation5], %s67
      %s69 = sshll.u32 [#allocation6], 4
      %s70 = int_to_ptr.vmem [resolvable:$true] %s69
      %75 = dma.vmem_to_hbm [thread:$0]  %s70, 256, %s3, [#allocation5], 128, 128, 8
    $region21: #{tpu_custom_call.1} parent=1 // pred_fallthru
      _
    // Predicated region
    $region22: #{tpu_custom_call.1} parent=1 // pred_check
      _
    $region23: #{tpu_custom_call.1} parent=1 // pred_check_branch
      %77 = sbr.rel (0) target = $region25
    $region24: #{tpu_custom_call.1} parent=1 // pred_region
      %78 = dma.done [#allocation5], 256
    $region25: #{tpu_custom_call.1} parent=1 // pred_fallthru
      _
    %79 = vsyncpa [#allocation4], 1
    %80 = vsyncpa [#allocation5], 1

</llo_original>
